<compile_context>
chip_gen: v6e
topology: v6e:2x2x1
jax: 0.10.0
libtpu: 0.0.40
codegen_flags: <defaults>
</compile_context>

<pallas_src>
import jax
import jax.numpy as jnp
from jax.experimental import pallas as pl
from jax.experimental.pallas import tpu as pltpu


_VMEM_INPUT_BUDGET_BYTES = 8 * 1024 * 1024  # per-step sum of input blocks (one buffer)


def _cdiv(a: int, b: int) -> int:
    return -(-a // b)


def _sublane_multiple(dtype) -> int:
    """Native sublane tile height: 8 for 4-byte, 16 for 2-byte, 32 for 1-byte dtypes."""
    return max(8, 32 // jnp.dtype(dtype).itemsize)


def _choose_batch_block(B: int, sub: int) -> int:
    """Batch rows per grid step.

    Multiple of the dtype sublane tile so the (TB, D) output block stores are
    lane/sublane-dense; capped at 128; prefers an even number of batch blocks
    so v7x's two TensorCores split the "parallel" axis evenly (no effect on
    single-TC v5e/v6e).  If B is below one sublane tile, use the full batch
    (block dim == full array dim is legal).
    """
    if B <= sub:
        return B
    cap = min(128, (B // sub) * sub)
    for tb in range(cap, sub - 1, -sub):
        if _cdiv(B, tb) % 2 == 0:
            return tb
    return cap


def _choose_frame_block(t_lens, dtypes, tb: int, d: int, budget_bytes: int) -> int:
    """Frames per chunk on the shared frame grid axis.

    Aligned to the widest input dtype's sublane tile and sized so the sum of
    all videos' per-step input blocks stays within `budget_bytes` (one
    pipeline buffer's worth); capped at the longest video.
    """
    sub = max(_sublane_multiple(dt) for dt in dtypes)
    bytes_per_frame = tb * d * sum(jnp.dtype(dt).itemsize for dt in dtypes)
    tt = (budget_bytes // max(bytes_per_frame, 1)) // sub * sub
    tt = max(tt, sub)
    tt = min(tt, max(t_lens))
    return max(tt, 1)


def _make_video_index_map(n_chunks: int):
    """Index map for one video's (TB, TT, D) blocks over grid axes (b, k).

    Clamps the chunk index so that once a (shorter) video runs out of chunks
    the block index stops changing; Pallas then skips the redundant DMA.
    """
    last = n_chunks - 1
    if last == 0:
        return lambda b, k: (b, 0, 0)

    def index_map(b, k):
        return (b, jnp.minimum(k, last), 0)

    return index_map


def _accumulate_video(acc_ref, ref, t_len: int, tt: int, k, n_total_chunks: int):
    """acc_ref (TB, D) fp32 += sum over this video's frames in chunk k."""
    n_chunks = _cdiv(t_len, tt)
    divides = (t_len % tt) == 0

    def add_full():
        acc_ref[...] += jnp.sum(ref[...], axis=1, dtype=jnp.float32)

    def add_masked():
        # Mask out padded tail frames of the last (partial) chunk before the sum.
        rem = t_len - k * tt  # > 0 whenever this body runs
        frame_id = jax.lax.broadcasted_iota(jnp.int32, (1, tt, 1), 1)
        x = jnp.where(frame_id < rem, ref[...], 0)
        acc_ref[...] += jnp.sum(x, axis=1, dtype=jnp.float32)

    body = add_full if divides else add_masked
    if n_chunks == n_total_chunks:
        body()  # every grid chunk is in range for this video
    else:
        pl.when(k < n_chunks)(body)  # skip out-of-range chunks of shorter videos


def _make_clip_kernel(video_meta, n_total_chunks: int, inv_t: float):
    """video_meta: list of (t_len, tt) per video."""
    num_videos = len(video_meta)

    def kernel(*refs):
        vid_refs = refs[:num_videos]
        o_ref = refs[num_videos]
        acc_ref = refs[num_videos + 1]
        k = pl.program_id(1)

        @pl.when(k == 0)
        def _init():
            acc_ref[...] = jnp.zeros_like(acc_ref)

        for r, (t_len, tt) in zip(vid_refs, video_meta):
            _accumulate_video(acc_ref, r, t_len, tt, k, n_total_chunks)

        @pl.when(k == n_total_chunks - 1)
        def _finalize():
            # mean = sum * (1/T); kept (rather than cancelled into the norm)
            # to bound the squared-norm magnitude — one (TB, D) mul, DMA-bound
            # regime so it is free filler.
            feat = acc_ref[...] * inv_t
            # F.normalize(dim=-1): x / max(||x||, 1e-12) == x * rsqrt(max(||x||^2, 1e-24))
            sq = jnp.sum(feat * feat, axis=-1, keepdims=True)
            inv_norm = jax.lax.rsqrt(jnp.maximum(sq, 1e-24))
            o_ref[...] = (feat * inv_norm).astype(o_ref.dtype)

    return kernel


def clip_encoder_forward(*videos, frame_block_budget_bytes: int = _VMEM_INPUT_BUDGET_BYTES):
    """Pallas implementation of CLIPEncoder.forward.

    Each video: (B, T_i, D). Returns (B, D) L2-normalized mean feature in the
    (promoted) input dtype.
    """
    assert len(videos) >= 1
    B, _, D = videos[0].shape
    for v in videos:
        assert v.ndim == 3 and v.shape[0] == B and v.shape[2] == D

    t_lens = [int(v.shape[1]) for v in videos]
    t_total = sum(t_lens)
    out_dtype = jnp.result_type(*videos)
    in_dtypes = [v.dtype for v in videos]

    # dtype-aware sublane alignment (8 fp32 / 16 bf16 / 32 int8), widest wins.
    sub = max([_sublane_multiple(out_dtype)] + [_sublane_multiple(dt) for dt in in_dtypes])

    TB = _choose_batch_block(B, sub)
    tt_global = _choose_frame_block(t_lens, in_dtypes, TB, D, frame_block_budget_bytes)
    tt_per_video = [min(tt_global, t) for t in t_lens]
    n_chunks_per_video = [_cdiv(t, tt) for t, tt in zip(t_lens, tt_per_video)]
    n_total_chunks = max(n_chunks_per_video)

    grid = (pl.cdiv(B, TB), n_total_chunks)

    in_specs = [
        pl.BlockSpec((TB, tt, D), _make_video_index_map(n_i))
        for tt, n_i in zip(tt_per_video, n_chunks_per_video)
    ]
    out_specs = pl.BlockSpec((TB, D), lambda b, k: (b, 0))

    # Explicit scoped-VMEM sizing: double-buffered input blocks + output block
    # buffers + fp32 accumulator scratch, 2x headroom (covers the fp32 reduce
    # temporaries and compiler scratch).  Floor 32 MiB, cap 64 MiB (v7x per-TC
    # physical VMEM).
    in_block_bytes = sum(
        TB * tt * D * jnp.dtype(dt).itemsize for tt, dt in zip(tt_per_video, in_dtypes)
    )
    out_block_bytes = TB * D * jnp.dtype(out_dtype).itemsize
    scratch_bytes = TB * D * 4
    vmem_need = 2 * in_block_bytes + 2 * out_block_bytes + scratch_bytes
    vmem_limit = int(min(max(2 * vmem_need, 32 * 1024 * 1024), 64 * 1024 * 1024))

    in_bytes = sum(B * t * D * jnp.dtype(dt).itemsize for t, dt in zip(t_lens, in_dtypes))
    out_bytes = B * D * jnp.dtype(out_dtype).itemsize
    cost = pl.CostEstimate(
        flops=2 * B * t_total * D + 4 * B * D,
        transcendentals=B,
        bytes_accessed=in_bytes + out_bytes,
    )

    kernel = _make_clip_kernel(
        list(zip(t_lens, tt_per_video)), n_total_chunks, 1.0 / float(t_total)
    )

    return pl.pallas_call(
        kernel,
        out_shape=jax.ShapeDtypeStruct((B, D), out_dtype),
        grid_spec=pltpu.PrefetchScalarGridSpec(
            num_scalar_prefetch=0,
            grid=grid,
            in_specs=in_specs,
            out_specs=out_specs,
            scratch_shapes=[pltpu.VMEM((TB, D), jnp.float32)],
        ),
        compiler_params=pltpu.CompilerParams(
            dimension_semantics=("parallel", "arbitrary"),
            vmem_limit_bytes=vmem_limit,
        ),
        cost_estimate=cost,
    )(*videos)


def _reference(*videos):
    x = jnp.concatenate([v.astype(jnp.float32) for v in videos], axis=1)
    feat = jnp.mean(x, axis=1)
    norm = jnp.sqrt(jnp.sum(feat * feat, axis=-1, keepdims=True))
    return feat / jnp.maximum(norm, 1e-12)


if __name__ == "__main__":
    # CLIPEncoder has no parameters (its __init__ defines none).
    key = jax.random.PRNGKey(0)
    k1, k2, k3, k4 = jax.random.split(key, 4)

    # Case 1: small demo shapes (single frame chunk per video).
    B, T1, T2, D = 2, 8, 16, 128
    video_a = jax.random.normal(k1, (B, T1, D), dtype=jnp.float32)
    video_b = jax.random.normal(k2, (B, T2, D), dtype=jnp.float32)

    out = clip_encoder_forward(video_a, video_b)
    out = jax.block_until_ready(out)

    ref = _reference(video_a, video_b)
    assert out.shape == (B, D), out.shape
    assert out.dtype == jnp.float32, out.dtype
    assert jnp.allclose(out, ref, atol=1e-5, rtol=1e-5), "mismatch vs reference (case 1)"

    # Case 2: force the frame-chunked path (unequal, non-divisible T lengths)
    # with a tiny per-step budget -> exercises the accumulator init/finalize,
    # pl.when guards for short videos, and partial-tail masking.
    T3, T4 = 20, 8
    video_c = jax.random.normal(k3, (B, T3, D), dtype=jnp.float32)
    video_d = jax.random.normal(k4, (B, T4, D), dtype=jnp.float32)

    out2 = clip_encoder_forward(video_c, video_d, frame_block_budget_bytes=16 * 1024)
    out2 = jax.block_until_ready(out2)

    ref2 = _reference(video_c, video_d)
    assert out2.shape == (B, D), out2.shape
    assert jnp.allclose(out2, ref2, atol=1e-5, rtol=1e-5), "mismatch vs reference (case 2)"

    print("KERNEL_OK")
</pallas_src>

<mosaic_0001>
module attributes {stable_mosaic.version = 11 : i64} {
  func.func @kernel(%arg0: i32, %arg1: i32, %arg2: memref<2x8x128xf32, #tpu.memory_space<vmem>>, %arg3: memref<2x16x128xf32, #tpu.memory_space<vmem>>, %arg4: memref<2x128xf32, #tpu.memory_space<vmem>>, %arg5: memref<2x128xf32, #tpu.memory_space<vmem>>) attributes {dimension_semantics = [#tpu.dimension_semantics<parallel>, #tpu.dimension_semantics<arbitrary>], iteration_bounds = array<i64: 1, 1>, scalar_prefetch = 0 : i64, scratch_operands = 1 : i64, tpu.core_type = #tpu.core_type<tc>, window_params = [{transform_indices = @transform_0, window_bounds = array<i64: 2, 8, 128>}, {transform_indices = @transform_1, window_bounds = array<i64: 2, 16, 128>}, {transform_indices = @transform_2, window_bounds = array<i64: 2, 128>}]} {
    %c0_i32 = arith.constant 0 : i32
    %0 = arith.cmpi eq, %arg1, %c0_i32 : i32
    %1 = arith.extui %0 : i1 to i32
    %c0_i32_0 = arith.constant 0 : i32
    %2 = arith.cmpi ne, %1, %c0_i32_0 : i32
    scf.if %2 {
      %cst_17 = arith.constant 0.000000e+00 : f32
      %16 = vector.broadcast %cst_17 : f32 to vector<2x128xf32>
      %c0_18 = arith.constant 0 : index
      %c0_19 = arith.constant 0 : index
      %17 = vector.load %arg5[%c0_18, %c0_19] : memref<2x128xf32, #tpu.memory_space<vmem>>, vector<2x128xf32>
      tpu.vector_store %arg5[%c0_18, %c0_19], %16 {strides = array<i32>} : memref<2x128xf32, #tpu.memory_space<vmem>>, vector<2x128xf32>,
    } else {
    }
    %c0 = arith.constant 0 : index
    %c0_1 = arith.constant 0 : index
    %3 = vector.load %arg5[%c0, %c0_1] : memref<2x128xf32, #tpu.memory_space<vmem>>, vector<2x128xf32>
    %c0_2 = arith.constant 0 : index
    %c0_3 = arith.constant 0 : index
    %c0_4 = arith.constant 0 : index
    %4 = vector.load %arg2[%c0_2, %c0_3, %c0_4] : memref<2x8x128xf32, #tpu.memory_space<vmem>>, vector<2x8x128xf32>
    %cst = arith.constant dense<0.000000e+00> : vector<2x128xf32>
    %5 = vector.multi_reduction <add>, %4, %cst [1] : vector<2x8x128xf32> to vector<2x128xf32>
    %6 = arith.addf %3, %5 : vector<2x128xf32>
    %c0_5 = arith.constant 0 : index
    %c0_6 = arith.constant 0 : index
    %7 = vector.load %arg5[%c0_5, %c0_6] : memref<2x128xf32, #tpu.memory_space<vmem>>, vector<2x128xf32>
    tpu.vector_store %arg5[%c0_5, %c0_6], %6 {strides = array<i32>} : memref<2x128xf32, #tpu.memory_space<vmem>>, vector<2x128xf32>,
    %c0_7 = arith.constant 0 : index
    %c0_8 = arith.constant 0 : index
    %8 = vector.load %arg5[%c0_7, %c0_8] : memref<2x128xf32, #tpu.memory_space<vmem>>, vector<2x128xf32>
    %c0_9 = arith.constant 0 : index
    %c0_10 = arith.constant 0 : index
    %c0_11 = arith.constant 0 : index
    %9 = vector.load %arg3[%c0_9, %c0_10, %c0_11] : memref<2x16x128xf32, #tpu.memory_space<vmem>>, vector<2x16x128xf32>
    %cst_12 = arith.constant dense<0.000000e+00> : vector<2x128xf32>
    %10 = vector.multi_reduction <add>, %9, %cst_12 [1] : vector<2x16x128xf32> to vector<2x128xf32>
    %11 = arith.addf %8, %10 : vector<2x128xf32>
    %c0_13 = arith.constant 0 : index
    %c0_14 = arith.constant 0 : index
    %12 = vector.load %arg5[%c0_13, %c0_14] : memref<2x128xf32, #tpu.memory_space<vmem>>, vector<2x128xf32>
    tpu.vector_store %arg5[%c0_13, %c0_14], %11 {strides = array<i32>} : memref<2x128xf32, #tpu.memory_space<vmem>>, vector<2x128xf32>,
    %c0_i32_15 = arith.constant 0 : i32
    %13 = arith.cmpi eq, %arg1, %c0_i32_15 : i32
    %14 = arith.extui %13 : i1 to i32
    %c0_i32_16 = arith.constant 0 : i32
    %15 = arith.cmpi ne, %14, %c0_i32_16 : i32
    scf.if %15 {
      %c0_17 = arith.constant 0 : index
      %c0_18 = arith.constant 0 : index
      %16 = vector.load %arg5[%c0_17, %c0_18] : memref<2x128xf32, #tpu.memory_space<vmem>>, vector<2x128xf32>
      %cst_19 = arith.constant 0.0416666679 : f32
      %17 = vector.broadcast %cst_19 : f32 to vector<2x128xf32>
      %18 = arith.mulf %16, %17 : vector<2x128xf32>
      %19 = arith.mulf %18, %18 : vector<2x128xf32>
      %cst_20 = arith.constant dense<0.000000e+00> : vector<2xf32>
      %20 = vector.multi_reduction <add>, %19, %cst_20 [1] : vector<2x128xf32> to vector<2xf32>
      %21 = vector.shape_cast %20 : vector<2xf32> to vector<2x1xf32>
      %cst_21 = arith.constant 1.000000e-24 : f32
      %22 = vector.broadcast %cst_21 : f32 to vector<2x1xf32>
      %23 = arith.maximumf %21, %22 : vector<2x1xf32>
      %24 = math.rsqrt %23 : vector<2x1xf32>
      %25 = vector.broadcast %24 : vector<2x1xf32> to vector<2x128xf32>
      %26 = arith.mulf %18, %25 : vector<2x128xf32>
      %c0_22 = arith.constant 0 : index
      %c0_23 = arith.constant 0 : index
      %27 = vector.load %arg4[%c0_22, %c0_23] : memref<2x128xf32, #tpu.memory_space<vmem>>, vector<2x128xf32>
      tpu.vector_store %arg4[%c0_22, %c0_23], %26 {strides = array<i32>} : memref<2x128xf32, #tpu.memory_space<vmem>>, vector<2x128xf32>,
    } else {
    }
    return
  }
  func.func @transform_0(%arg0: i32, %arg1: i32) -> (i32, i32, i32) {
    %c0_i32 = arith.constant 0 : i32
    %c0_i32_0 = arith.constant 0 : i32
    %c0_i32_1 = arith.constant 0 : i32
    return %arg0, %c0_i32, %c0_i32_0 : i32, i32, i32
  }
  func.func @transform_1(%arg0: i32, %arg1: i32) -> (i32, i32, i32) {
    %c0_i32 = arith.constant 0 : i32
    %c0_i32_0 = arith.constant 0 : i32
    %c0_i32_1 = arith.constant 0 : i32
    return %arg0, %c0_i32, %c0_i32_0 : i32, i32, i32
  }
  func.func @transform_2(%arg0: i32, %arg1: i32) -> (i32, i32) {
    %c0_i32 = arith.constant 0 : i32
    %c0_i32_0 = arith.constant 0 : i32
    return %arg0, %c0_i32 : i32, i32
  }
}

</mosaic_0001>

<llo_original>
// kernel: tpu_custom_call.1
$region0: #{tpu_custom_call.1}
  #allocation0 [shape = 'u32[]', space=smem, size = 0x4, offset = 0x4, fixed_abs, tag = 'smem constant byte address 0x4 - core index']
  #allocation1 [shape = 'u32[144,128]{1,0:T(1,128)}', space=vmem, size = 0x12000, scoped, tag = 'internal scratch']
  #allocation2 [shape = 'f32[2,128]{1,0:T(2,128)}', space=vmem, size = 0x400, scoped, tag = 'scratch operand']
  %s0 = inlined_call_operand.hbm [shape: f32[2,8,128], index: 0, kind: input, shape index: {}]
  %s1 = inlined_call_operand.hbm [shape: f32[2,16,128], index: 1, kind: input, shape index: {}]
  %s2 = inlined_call_operand.hbm [shape: f32[2,128], index: 2, kind: output, shape index: {}]
  %s3 = sld [smem:[#allocation0]]
  $region34: #{tpu_custom_call.1} parent=0
    _
  %s5 = ssub.s32 1, %s3
  %s6 = scalar_select 0, %s5, %s3
  $region1: #{tpu_custom_call.1} parent=0
    #allocation3 [shape = 'u8[8192]{0}', space=vmem, size = 0x2000, scoped, tag = 'input window, operand 0, single buffered']
    #allocation4 [shape = 's32[1]{0}', space=sflag, size = 0x4, scoped, tag = 'scoped memory for tpu_custom_call.1']
    #allocation5 [shape = 's32[1]{0}', space=sflag, size = 0x4, scoped, tag = 'scoped memory for tpu_custom_call.1']
    #allocation6 [shape = 'u8[16384]{0}', space=vmem, size = 0x4000, scoped, tag = 'input window, operand 1, single buffered']
    #allocation7 [shape = 's32[1]{0}', space=sflag, size = 0x4, scoped, tag = 'scoped memory for tpu_custom_call.1']
    #allocation8 [shape = 'u8[1024]{0}', space=vmem, size = 0x400, scoped, tag = 'output window, operand 0, single buffered']
    %7 = vsyncpa [#allocation4], 0
    %8 = vsyncpa [#allocation7], 0
    %9 = vsyncpa [#allocation5], 0
    // Predicated region
    $region2: #{tpu_custom_call.1} parent=1 // pred_check
      _
    $region3: #{tpu_custom_call.1} parent=1 // pred_check_branch
      %11 = sbr.rel (0) target = $region5
    $region4: #{tpu_custom_call.1} parent=1 // pred_region
      %s13 = ssub.s32 256, 256
      %14 = vsyncadd [#allocation4], %s13
      %s15 = sshll.u32 [#allocation3], 4
      %s16 = int_to_ptr.vmem [resolvable:$true] %s15
      %21 = dma.hbm_to_vmem [thread:$0]  %s0, 256, %s16, [#allocation4], 128, 128, 8
    $region5: #{tpu_custom_call.1} parent=1 // pred_fallthru
      _
    // Predicated region
    $region6: #{tpu_custom_call.1} parent=1 // pred_check
      _
    $region7: #{tpu_custom_call.1} parent=1 // pred_check_branch
      %23 = sbr.rel (0) target = $region9
    $region8: #{tpu_custom_call.1} parent=1 // pred_region
      %s25 = ssub.s32 512, 512
      %26 = vsyncadd [#allocation7], %s25
      %s27 = sshll.u32 [#allocation6], 4
      %s28 = int_to_ptr.vmem [resolvable:$true] %s27
      %33 = dma.hbm_to_vmem [thread:$0]  %s1, 512, %s28, [#allocation7], 128, 128, 8
    $region9: #{tpu_custom_call.1} parent=1 // pred_fallthru
      _
    // Predicated region
    $region10: #{tpu_custom_call.1} parent=1 // pred_check
      _
    $region11: #{tpu_custom_call.1} parent=1 // pred_check_branch
      %35 = sbr.rel (0) target = $region13
    $region12: #{tpu_custom_call.1} parent=1 // pred_region
      %36 = dma.done [#allocation4], 256
    $region13: #{tpu_custom_call.1} parent=1 // pred_fallthru
      _
    // Predicated region
    $region14: #{tpu_custom_call.1} parent=1 // pred_check
      _
    $region15: #{tpu_custom_call.1} parent=1 // pred_check_branch
      %38 = sbr.rel (0) target = $region17
    $region16: #{tpu_custom_call.1} parent=1 // pred_region
      %39 = dma.done [#allocation7], 512
    $region17: #{tpu_custom_call.1} parent=1 // pred_fallthru
      _
    %p40 = scmp.eq.s32.totalorder 0, 0
    // Predicated region
    $region18: #{tpu_custom_call.1} parent=1 // pred_check
      %p41 = pneg %p40
    $region19: #{tpu_custom_call.1} parent=1 // pred_check_branch
      %43 = sbr.rel (%p41) target = $region21
    $region20: #{tpu_custom_call.1} parent=1 // pred_region
      %44 = vst [vmem:[#allocation2] sm:$0x3] 0.0
    $region21: #{tpu_custom_call.1} parent=1 // pred_fallthru
      _
    %v45 = vld [vmem:[#allocation2] sm:$0x3]
    %v46 = vld [vmem:[#allocation3] sm:$0xff]
    %v47 = vld [vmem:[#allocation3 + $0x8] sm:$0xff]
    %v48 = vrot.slane %v46, 4
    %v49 = vadd.f32 %v46, %v48
    %v50 = vrot.slane %v49, 2
    %v51 = vadd.f32 %v49, %v50
    %v52 = vrot.slane %v51, 1
    %v53 = vadd.f32 %v51, %v52
    %v54 = vrot.slane %v47, 4
    %v55 = vadd.f32 %v47, %v54
    %v56 = vrot.slane %v55, 2
    %v57 = vadd.f32 %v55, %v56
    %v58 = vrot.slane %v57, 1
    %v59 = vadd.f32 %v57, %v58
    %vm62 = vcmask 1041409
    %v63 = vsel %vm62, %v59, %v53
    %v65 = vadd.f32 %v45, %v63
    %66 = vst [vmem:[#allocation2] sm:$0x3] %v65
    %v67 = vld [vmem:[#allocation2] sm:$0x3]
    %v68 = vld [vmem:[#allocation6] sm:$0xff]
    %v69 = vld [vmem:[#allocation6 + $0x8] sm:$0xff]
    %v70 = vld [vmem:[#allocation6 + $0x10] sm:$0xff]
    %v71 = vld [vmem:[#allocation6 + $0x18] sm:$0xff]
    %v72 = vadd.f32 %v68, %v69
    %v73 = vrot.slane %v72, 4
    %v74 = vadd.f32 %v72, %v73
    %v75 = vrot.slane %v74, 2
    %v76 = vadd.f32 %v74, %v75
    %v77 = vrot.slane %v76, 1
    %v78 = vadd.f32 %v76, %v77
    %v79 = vadd.f32 %v70, %v71
    %v80 = vrot.slane %v79, 4
    %v81 = vadd.f32 %v79, %v80
    %v82 = vrot.slane %v81, 2
    %v83 = vadd.f32 %v81, %v82
    %v84 = vrot.slane %v83, 1
    %v85 = vadd.f32 %v83, %v84
    %v88 = vsel %vm62, %v85, %v78
    %v90 = vadd.f32 %v67, %v88
    %91 = vst [vmem:[#allocation2] sm:$0x3] %v90
    // Predicated region
    $region22: #{tpu_custom_call.1} parent=1 // pred_check
      %p92 = pneg %p40
    $region23: #{tpu_custom_call.1} parent=1 // pred_check_branch
      %94 = sbr.rel (%p92) target = $region25
    $region24: #{tpu_custom_call.1} parent=1 // pred_region
      %v95 = vld [vmem:[#allocation2] sm:$0x3]
      %v96 = vmul.f32 %v95, 0.041666668
      %v97 = vmul.f32 %v96, %v96
      %vm98 = vcmask 1041408
      %v99 = vsel %vm98, %v97, 0.0
      %100 = vadd.xlane.f32.xlu0 %v99
      %v101 = vpop.xlane.xlu0 %100
      %v102 = vmax.f32 %v101, 1e-24
      %v103 = vrsqrt.pop %v102
      %v104 = vmul.f32 %v96, %v103
      %105 = vst [vmem:[#allocation8] sm:$0x3] %v104
    $region25: #{tpu_custom_call.1} parent=1 // pred_fallthru
      _
    // Predicated region
    $region26: #{tpu_custom_call.1} parent=1 // pred_check
      _
    $region27: #{tpu_custom_call.1} parent=1 // pred_check_branch
      %107 = sbr.rel (0) target = $region29
    $region28: #{tpu_custom_call.1} parent=1 // pred_region
      %s109 = ssub.s32 32, 32
      %110 = vsyncadd [#allocation5], %s109
      %s112 = sshll.u32 [#allocation8], 4
      %s113 = int_to_ptr.vmem [resolvable:$true] %s112
      %115 = dma.vmem_to_hbm [thread:$0]  %s113, 32, %s2, [#allocation5]
    $region29: #{tpu_custom_call.1} parent=1 // pred_fallthru
      _
    // Predicated region
    $region30: #{tpu_custom_call.1} parent=1 // pred_check
      _
    $region31: #{tpu_custom_call.1} parent=1 // pred_check_branch
      %117 = sbr.rel (0) target = $region33
    $region32: #{tpu_custom_call.1} parent=1 // pred_region
      %118 = dma.done [#allocation5], 32
    $region33: #{tpu_custom_call.1} parent=1 // pred_fallthru
      _
    %119 = vsyncpa [#allocation4], 1
    %120 = vsyncpa [#allocation7], 1
    %121 = vsyncpa [#allocation5], 1

</llo_original>
